<compile_context>
chip_gen: v7x
topology: tpu7x:2x2x1
jax: 0.10.0
libtpu: 0.0.40
codegen_flags: <defaults>
</compile_context>

<pallas_src>
import jax
import jax.numpy as jnp
from jax import lax
from jax.experimental import pallas as pl
from jax.experimental.pallas import tpu as pltpu


def linear_kernel(x_ref, w_ref, b_ref, o_ref):
    x = x_ref[...]          # [TB, in_dim]
    w = w_ref[...]          # [n_class, in_dim]  (torch layout, in_dim on lanes)
    b = b_ref[...]          # [1, n_class]
    # out[m, n] = sum_k x[m, k] * w[n, k]   (== x @ w.T, torch nn.Linear)
    acc = lax.dot_general(
        x, w,
        dimension_numbers=(((1,), (1,)), ((), ())),
        preferred_element_type=jnp.float32,
    )                        # [TB, n_class], f32 accumulate
    o_ref[...] = (acc + b).astype(o_ref.dtype)


def logistic_regression_forward(x, weight, bias, *, tb=512):
    """x: [B, in_dim]; weight: [n_class, in_dim] (torch layout); bias: [n_class]."""
    B, in_dim = x.shape
    n_class = weight.shape[0]

    # Batch tile: full batch if small, else a sublane-aligned tile (multiple of 8).
    TB = min(tb, B)
    if TB != B:
        TB = max(8, (TB // 8) * 8)
    grid = (pl.cdiv(B, TB),)

    b2d = bias.reshape(1, n_class)   # 2-D for VMEM friendliness

    return pl.pallas_call(
        linear_kernel,
        out_shape=jax.ShapeDtypeStruct((B, n_class), x.dtype),
        grid=grid,
        in_specs=[
            # x: streamed per grid step (pipelined / double-buffered).
            pl.BlockSpec((TB, in_dim), lambda i: (i, 0)),
            # weight / bias: constant block index -> stay resident in VMEM.
            pl.BlockSpec((n_class, in_dim), lambda i: (0, 0)),
            pl.BlockSpec((1, n_class), lambda i: (0, 0)),
        ],
        out_specs=pl.BlockSpec((TB, n_class), lambda i: (i, 0)),
        compiler_params=pltpu.CompilerParams(
            dimension_semantics=("parallel",)),
    )(x, weight, b2d)


if __name__ == "__main__":
    # MNIST-style shapes: in_dim = 28*28 = 784, n_class = 10.
    in_dim, n_class = 784, 10

    key = jax.random.PRNGKey(0)
    kx, kw, kb = jax.random.split(key, 3)

    # Torch-style init: uniform(-1/sqrt(in_dim), 1/sqrt(in_dim)).
    bound = 1.0 / jnp.sqrt(jnp.float32(in_dim))
    weight = jax.random.uniform(kw, (n_class, in_dim), jnp.float32, -bound, bound)
    bias = jax.random.uniform(kb, (n_class,), jnp.float32, -bound, bound)

    # Case 1: small batch, single grid step (TB == B).
    batch = 8
    x = jax.random.normal(kx, (batch, in_dim), jnp.float32)
    out = jax.block_until_ready(logistic_regression_forward(x, weight, bias))
    ref = x @ weight.T + bias
    assert out.shape == (batch, n_class)
    assert jnp.allclose(out, ref, atol=1e-4, rtol=1e-4)

    # Case 2: exercise the batch-tiled pipeline (grid > 1) at a still-small shape.
    batch2 = 64
    x2 = jax.random.normal(kx, (batch2, in_dim), jnp.float32)
    out2 = jax.block_until_ready(
        logistic_regression_forward(x2, weight, bias, tb=16))
    ref2 = x2 @ weight.T + bias
    assert out2.shape == (batch2, n_class)
    assert jnp.allclose(out2, ref2, atol=1e-4, rtol=1e-4)

    print("KERNEL_OK")
</pallas_src>

<mosaic_0001>
module attributes {stable_mosaic.version = 11 : i64} {
  func.func @linear_kernel(%arg0: i32, %arg1: memref<8x784xf32, #tpu.memory_space<vmem>>, %arg2: memref<10x784xf32, #tpu.memory_space<vmem>>, %arg3: memref<1x10xf32, #tpu.memory_space<vmem>>, %arg4: memref<8x10xf32, #tpu.memory_space<vmem>>) attributes {dimension_semantics = [#tpu.dimension_semantics<parallel>], iteration_bounds = array<i64: 1>, scalar_prefetch = 0 : i64, scratch_operands = 0 : i64, tpu.core_type = #tpu.core_type<tc>, window_params = [{transform_indices = @transform_0, window_bounds = array<i64: 8, 784>}, {pipeline_mode = #tpu.pipeline_mode<synchronous>, transform_indices = @transform_1, window_bounds = array<i64: 10, 784>}, {pipeline_mode = #tpu.pipeline_mode<synchronous>, transform_indices = @transform_2, window_bounds = array<i64: 1, 10>}, {transform_indices = @transform_3, window_bounds = array<i64: 8, 10>}]} {
    %c0 = arith.constant 0 : index
    %c0_0 = arith.constant 0 : index
    %0 = vector.load %arg1[%c0, %c0_0] : memref<8x784xf32, #tpu.memory_space<vmem>>, vector<8x784xf32>
    %c0_1 = arith.constant 0 : index
    %c0_2 = arith.constant 0 : index
    %1 = vector.load %arg2[%c0_1, %c0_2] : memref<10x784xf32, #tpu.memory_space<vmem>>, vector<10x784xf32>
    %c0_3 = arith.constant 0 : index
    %c0_4 = arith.constant 0 : index
    %2 = vector.load %arg3[%c0_3, %c0_4] : memref<1x10xf32, #tpu.memory_space<vmem>>, vector<1x10xf32>
    %cst = arith.constant dense<0.000000e+00> : vector<8x10xf32>
    %3 = tpu.matmul %0, %1, %cst {dimension_numbers = #tpu.dot_dimension_numbers<[1], [1], [0], [0], [0, 0, 1, 0], [], []>} : vector<8x784xf32>, vector<10x784xf32>, vector<8x10xf32> -> vector<8x10xf32>
    %4 = vector.broadcast %2 : vector<1x10xf32> to vector<8x10xf32>
    %5 = arith.addf %3, %4 : vector<8x10xf32>
    %c0_5 = arith.constant 0 : index
    %c0_6 = arith.constant 0 : index
    %6 = vector.load %arg4[%c0_5, %c0_6] : memref<8x10xf32, #tpu.memory_space<vmem>>, vector<8x10xf32>
    tpu.vector_store %arg4[%c0_5, %c0_6], %5 {strides = array<i32>} : memref<8x10xf32, #tpu.memory_space<vmem>>, vector<8x10xf32>,
    return
  }
  func.func @transform_0(%arg0: i32) -> (i32, i32) {
    %c0_i32 = arith.constant 0 : i32
    %c0_i32_0 = arith.constant 0 : i32
    return %arg0, %c0_i32 : i32, i32
  }
  func.func @transform_1(%arg0: i32) -> (i32, i32) {
    %c0_i32 = arith.constant 0 : i32
    %c0_i32_0 = arith.constant 0 : i32
    %c0_i32_1 = arith.constant 0 : i32
    return %c0_i32, %c0_i32_0 : i32, i32
  }
  func.func @transform_2(%arg0: i32) -> (i32, i32) {
    %c0_i32 = arith.constant 0 : i32
    %c0_i32_0 = arith.constant 0 : i32
    %c0_i32_1 = arith.constant 0 : i32
    return %c0_i32, %c0_i32_0 : i32, i32
  }
  func.func @transform_3(%arg0: i32) -> (i32, i32) {
    %c0_i32 = arith.constant 0 : i32
    %c0_i32_0 = arith.constant 0 : i32
    return %arg0, %c0_i32 : i32, i32
  }
}

</mosaic_0001>

<llo_original>
// kernel: tpu_custom_call.1
$region0: #{tpu_custom_call.1}
  #allocation0 [shape = 'u32[]', space=smem, size = 0x4, offset = 0x4, fixed_abs, tag = 'smem constant byte address 0x4 - core index']
  #allocation1 [shape = 'u32[144,128]{1,0:T(1,128)}', space=vmem, size = 0x12000, scoped, tag = 'internal scratch']
  %s0 = inlined_call_operand.hbm [shape: f32[8,784], index: 0, kind: input, shape index: {}]
  %s1 = inlined_call_operand.hbm [shape: f32[10,784], index: 1, kind: input, shape index: {}]
  %s2 = inlined_call_operand.vmem [shape: f32[1,10], index: 2, kind: input, shape index: {}]
  %s3 = inlined_call_operand.hbm [shape: f32[8,10], index: 3, kind: output, shape index: {}]
  %s4 = sld [smem:[#allocation0]]
  $region30: #{tpu_custom_call.1} parent=0
    _
  %s6 = ssub.s32 1, %s4
  %s7 = scalar_select 0, %s6, %s4
  $region1: #{tpu_custom_call.1} parent=0
    #allocation2 [shape = 'u8[28672]{0}', space=vmem, size = 0x7000, scoped, tag = 'input window, operand 0, single buffered']
    #allocation3 [shape = 's32[1]{0}', space=sflag, size = 0x4, scoped, tag = 'scoped memory for tpu_custom_call.1']
    #allocation4 [shape = 's32[1]{0}', space=sflag, size = 0x4, scoped, tag = 'scoped memory for tpu_custom_call.1']
    #allocation5 [shape = 'u8[57344]{0}', space=vmem, size = 0xe000, scoped, tag = 'input window, operand 1, single buffered']
    #allocation6 [shape = 's32[1]{0}', space=sflag, size = 0x4, scoped, tag = 'scoped memory for tpu_custom_call.1']
    #allocation7 [shape = 'u8[4096]{0}', space=vmem, size = 0x1000, scoped, tag = 'output window, operand 0, single buffered']
    %8 = vsyncpa [#allocation3], 0
    %9 = vsyncpa [#allocation6], 0
    %10 = vsyncpa [#allocation4], 0
    // Predicated region
    $region2: #{tpu_custom_call.1} parent=1 // pred_check
      _
    $region3: #{tpu_custom_call.1} parent=1 // pred_check_branch
      %12 = sbr.rel (0) target = $region5
    $region4: #{tpu_custom_call.1} parent=1 // pred_region
      %s14 = ssub.s32 896, 896
      %15 = vsyncadd [#allocation3], %s14
      %s17 = sshll.u32 [#allocation2], 4
      %s18 = int_to_ptr.vmem [resolvable:$true] %s17
      %20 = dma.hbm_to_vmem [thread:$0]  %s0, 896, %s18, [#allocation3]
    $region5: #{tpu_custom_call.1} parent=1 // pred_fallthru
      _
    // Predicated region
    $region6: #{tpu_custom_call.1} parent=1 // pred_check
      _
    $region7: #{tpu_custom_call.1} parent=1 // pred_check_branch
      %22 = sbr.rel (0) target = $region9
    $region8: #{tpu_custom_call.1} parent=1 // pred_region
      %s24 = ssub.s32 1792, 1792
      %25 = vsyncadd [#allocation6], %s24
      %s26 = sshll.u32 [#allocation5], 4
      %s27 = int_to_ptr.vmem [resolvable:$true] %s26
      %32 = dma.hbm_to_vmem [thread:$0]  %s1, 1792, %s27, [#allocation6], 896, 896, 56
    $region9: #{tpu_custom_call.1} parent=1 // pred_fallthru
      _
    // Predicated region
    $region10: #{tpu_custom_call.1} parent=1 // pred_check
      _
    $region11: #{tpu_custom_call.1} parent=1 // pred_check_branch
      %34 = sbr.rel (0) target = $region13
    $region12: #{tpu_custom_call.1} parent=1 // pred_region
      _
    $region13: #{tpu_custom_call.1} parent=1 // pred_fallthru
      _
    // Predicated region
    $region14: #{tpu_custom_call.1} parent=1 // pred_check
      _
    $region15: #{tpu_custom_call.1} parent=1 // pred_check_branch
      %36 = sbr.rel (0) target = $region17
    $region16: #{tpu_custom_call.1} parent=1 // pred_region
      %37 = dma.done [#allocation3], 896
    $region17: #{tpu_custom_call.1} parent=1 // pred_fallthru
      _
    // Predicated region
    $region18: #{tpu_custom_call.1} parent=1 // pred_check
      _
    $region19: #{tpu_custom_call.1} parent=1 // pred_check_branch
      %39 = sbr.rel (0) target = $region21
    $region20: #{tpu_custom_call.1} parent=1 // pred_region
      %40 = dma.done [#allocation6], 1792
    $region21: #{tpu_custom_call.1} parent=1 // pred_fallthru
      _
    %v41 = vld [vmem:[#allocation2] sm:$0xff]
    %v42 = vld [vmem:[#allocation2 + $0x8] sm:$0xff]
    %v43 = vld [vmem:[#allocation2 + $0x10] sm:$0xff]
    %v44 = vld [vmem:[#allocation2 + $0x18] sm:$0xff]
    %v45 = vld [vmem:[#allocation2 + $0x20] sm:$0xff]
    %v46 = vld [vmem:[#allocation2 + $0x28] sm:$0xff]
    %v47 = vld [vmem:[#allocation2 + $0x30] sm:$0xff]
    %v48 = vld [vmem:[#allocation5] sm:$0xff]
    %v49 = vld [vmem:[#allocation5 + $0x8] sm:$0xff]
    %v50 = vld [vmem:[#allocation5 + $0x10] sm:$0xff]
    %v51 = vld [vmem:[#allocation5 + $0x18] sm:$0xff]
    %v52 = vld [vmem:[#allocation5 + $0x20] sm:$0xff]
    %v53 = vld [vmem:[#allocation5 + $0x28] sm:$0xff]
    %v54 = vld [vmem:[#allocation5 + $0x30] sm:$0xff]
    %v55 = vld [vmem:[#allocation5 + $0x38] sm:$0x3]
    %v56 = vld [vmem:[#allocation5 + $0x40] sm:$0x3]
    %v57 = vld [vmem:[#allocation5 + $0x48] sm:$0x3]
    %v58 = vld [vmem:[#allocation5 + $0x50] sm:$0x3]
    %v59 = vld [vmem:[#allocation5 + $0x58] sm:$0x3]
    %v60 = vld [vmem:[#allocation5 + $0x60] sm:$0x3]
    %v61 = vld [vmem:[#allocation5 + $0x68] sm:$0x3]
    %v62 = vld [vmem:[%s2] sm:$0x1]
    %v64 = vlaneseq
    %v65 = vshrl.u32 %v64, 7
    %v66 = vsub.s32 0, %v65
    %v67 = vrot.slane %v62, %v66
    %vm69 = vcmask 130048
    %v71 = vsel %vm69, %v47, 0
    %v74 = vsel %vm69, %v54, 0
    %v77 = vsel %vm69, %v61, 0
    %79 = vmatprep.subr.mxu0 %v49
    %80 = vmatpush1.xpose.msra.mxu0 %v48
    %81 = vmatprep.subr.mxu0 %v56
    %82 = vmatpush1.xpose.msra.mxu0 %v55
    %83 = vmatprep.subr.mxu0 0.0
    %84 = vmatpush1.xpose.msra.mxu0 0.0
    %85 = vmatprep.subr.mxu0 0.0
    %86 = vmatpush1.xpose.msra.mxu0 0.0
    %87 = vmatprep.subr.mxu0 0.0
    %88 = vmatpush1.xpose.msra.mxu0 0.0
    %89 = vmatprep.subr.mxu0 0.0
    %90 = vmatpush1.xpose.msra.mxu0 0.0
    %91 = vmatprep.subr.mxu0 0.0
    %92 = vmatpush1.xpose.msra.mxu0 0.0
    %93 = vmatprep.subr.mxu0 0.0
    %94 = vmatpush1.xpose.msra.mxu0 0.0
    %95 = vmatprep.subr.mxu0 0.0
    %96 = vmatpush1.xpose.msra.mxu0 0.0
    %97 = vmatprep.subr.mxu0 0.0
    %98 = vmatpush1.xpose.msra.mxu0 0.0
    %99 = vmatprep.subr.mxu0 0.0
    %100 = vmatpush1.xpose.msra.mxu0 0.0
    %101 = vmatprep.subr.mxu0 0.0
    %102 = vmatpush1.xpose.msra.mxu0 0.0
    %103 = vmatprep.subr.mxu0 0.0
    %104 = vmatpush1.xpose.msra.mxu0 0.0
    %105 = vmatprep.subr.mxu0 0.0
    %106 = vmatpush1.xpose.msra.mxu0 0.0
    %107 = vmatprep.subr.mxu0 0.0
    %108 = vmatpush1.xpose.msra.mxu0 0.0
    %109 = vmatprep.subr.mxu0 0.0
    %110 = vmatpush1.xpose.msra.mxu0 0.0
    %111 = vmatprep.subr.mxu0 0.0
    %112 = vmatpush1.xpose.msra.mxu0 0.0
    %113 = vmatprep.subr.mxu0 0.0
    %114 = vmatpush1.xpose.msra.mxu0 0.0
    %115 = vmatprep.subr.mxu0 0.0
    %116 = vmatpush1.xpose.msra.mxu0 0.0
    %117 = vmatprep.subr.mxu0 0.0
    %118 = vmatpush1.xpose.msra.mxu0 0.0
    %119 = vmatprep.subr.mxu0 0.0
    %120 = vmatpush1.xpose.msra.mxu0 0.0
    %121 = vmatprep.subr.mxu0 0.0
    %122 = vmatpush1.xpose.msra.mxu0 0.0
    %123 = vmatprep.subr.mxu0 0.0
    %124 = vmatpush1.xpose.msra.mxu0 0.0
    %125 = vmatprep.subr.mxu0 0.0
    %126 = vmatpush1.xpose.msra.mxu0 0.0
    %127 = vmatprep.subr.mxu0 0.0
    %128 = vmatpush1.xpose.msra.mxu0 0.0
    %129 = vmatprep.subr.mxu0 0.0
    %130 = vmatpush1.xpose.msra.mxu0 0.0
    %131 = vmatprep.subr.mxu0 0.0
    %132 = vmatpush1.xpose.msra.mxu0 0.0
    %133 = vmatprep.subr.mxu0 0.0
    %134 = vmatpush1.xpose.msra.mxu0 0.0
    %135 = vmatprep.subr.mxu0 0.0
    %136 = vmatpush1.xpose.msra.mxu0 0.0
    %137 = vmatprep.subr.mxu0 0.0
    %138 = vmatpush1.xpose.msra.mxu0 0.0
    %139 = vmatprep.subr.mxu0 0.0
    %140 = vmatpush1.xpose.msra.mxu0 0.0
    %141 = vmatprep.subr.mxu0 0.0
    %142 = vmatpush1.xpose.msra.mxu0 0.0
    %143 = vmatprep.mubr.f32.mxu0 %v42
    %144 = vmatmul.mubr.f32.gmra.mrb[0].mxu0 %v41
    %v145 = vpop.f32.mrb[0].mxu0
    %v146 = vadd.f32 %v67, %v145
    %v147 = vpop.f32.mrb[0].mxu0
    %148 = vdwg.mxu0
    %149 = vmatprep.subr.mxu0 %v51
    %150 = vmatpush1.xpose.msra.mxu0 %v50
    %151 = vmatprep.subr.mxu0 %v58
    %152 = vmatpush1.xpose.msra.mxu0 %v57
    %153 = vmatprep.subr.mxu0 0.0
    %154 = vmatpush1.xpose.msra.mxu0 0.0
    %155 = vmatprep.subr.mxu0 0.0
    %156 = vmatpush1.xpose.msra.mxu0 0.0
    %157 = vmatprep.subr.mxu0 0.0
    %158 = vmatpush1.xpose.msra.mxu0 0.0
    %159 = vmatprep.subr.mxu0 0.0
    %160 = vmatpush1.xpose.msra.mxu0 0.0
    %161 = vmatprep.subr.mxu0 0.0
    %162 = vmatpush1.xpose.msra.mxu0 0.0
    %163 = vmatprep.subr.mxu0 0.0
    %164 = vmatpush1.xpose.msra.mxu0 0.0
    %165 = vmatprep.subr.mxu0 0.0
    %166 = vmatpush1.xpose.msra.mxu0 0.0
    %167 = vmatprep.subr.mxu0 0.0
    %168 = vmatpush1.xpose.msra.mxu0 0.0
    %169 = vmatprep.subr.mxu0 0.0
    %170 = vmatpush1.xpose.msra.mxu0 0.0
    %171 = vmatprep.subr.mxu0 0.0
    %172 = vmatpush1.xpose.msra.mxu0 0.0
    %173 = vmatprep.subr.mxu0 0.0
    %174 = vmatpush1.xpose.msra.mxu0 0.0
    %175 = vmatprep.subr.mxu0 0.0
    %176 = vmatpush1.xpose.msra.mxu0 0.0
    %177 = vmatprep.subr.mxu0 0.0
    %178 = vmatpush1.xpose.msra.mxu0 0.0
    %179 = vmatprep.subr.mxu0 0.0
    %180 = vmatpush1.xpose.msra.mxu0 0.0
    %181 = vmatprep.subr.mxu0 0.0
    %182 = vmatpush1.xpose.msra.mxu0 0.0
    %183 = vmatprep.subr.mxu0 0.0
    %184 = vmatpush1.xpose.msra.mxu0 0.0
    %185 = vmatprep.subr.mxu0 0.0
    %186 = vmatpush1.xpose.msra.mxu0 0.0
    %187 = vmatprep.subr.mxu0 0.0
    %188 = vmatpush1.xpose.msra.mxu0 0.0
    %189 = vmatprep.subr.mxu0 0.0
    %190 = vmatpush1.xpose.msra.mxu0 0.0
    %191 = vmatprep.subr.mxu0 0.0
    %192 = vmatpush1.xpose.msra.mxu0 0.0
    %193 = vmatprep.subr.mxu0 0.0
    %194 = vmatpush1.xpose.msra.mxu0 0.0
    %195 = vmatprep.subr.mxu0 0.0
    %196 = vmatpush1.xpose.msra.mxu0 0.0
    %197 = vmatprep.subr.mxu0 0.0
    %198 = vmatpush1.xpose.msra.mxu0 0.0
    %199 = vmatprep.subr.mxu0 0.0
    %200 = vmatpush1.xpose.msra.mxu0 0.0
    %201 = vmatprep.subr.mxu0 0.0
    %202 = vmatpush1.xpose.msra.mxu0 0.0
    %203 = vmatprep.subr.mxu0 0.0
    %204 = vmatpush1.xpose.msra.mxu0 0.0
    %205 = vmatprep.subr.mxu0 0.0
    %206 = vmatpush1.xpose.msra.mxu0 0.0
    %207 = vmatprep.subr.mxu0 0.0
    %208 = vmatpush1.xpose.msra.mxu0 0.0
    %209 = vmatprep.subr.mxu0 0.0
    %210 = vmatpush1.xpose.msra.mxu0 0.0
    %211 = vmatprep.subr.mxu0 0.0
    %212 = vmatpush1.xpose.msra.mxu0 0.0
    %213 = vmatprep.mubr.f32.mxu0 %v44
    %214 = vmatmul.mubr.f32.gmra.mrb[0].mxu0 %v43
    %v215 = vpop.f32.mrb[0].mxu0
    %v216 = vadd.f32 %v146, %v215
    %v217 = vpop.f32.mrb[0].mxu0
    %218 = vdwg.mxu0
    %219 = vmatprep.subr.mxu0 %v53
    %220 = vmatpush1.xpose.msra.mxu0 %v52
    %221 = vmatprep.subr.mxu0 %v60
    %222 = vmatpush1.xpose.msra.mxu0 %v59
    %223 = vmatprep.subr.mxu0 0.0
    %224 = vmatpush1.xpose.msra.mxu0 0.0
    %225 = vmatprep.subr.mxu0 0.0
    %226 = vmatpush1.xpose.msra.mxu0 0.0
    %227 = vmatprep.subr.mxu0 0.0
    %228 = vmatpush1.xpose.msra.mxu0 0.0
    %229 = vmatprep.subr.mxu0 0.0
    %230 = vmatpush1.xpose.msra.mxu0 0.0
    %231 = vmatprep.subr.mxu0 0.0
    %232 = vmatpush1.xpose.msra.mxu0 0.0
    %233 = vmatprep.subr.mxu0 0.0
    %234 = vmatpush1.xpose.msra.mxu0 0.0
    %235 = vmatprep.subr.mxu0 0.0
    %236 = vmatpush1.xpose.msra.mxu0 0.0
    %237 = vmatprep.subr.mxu0 0.0
    %238 = vmatpush1.xpose.msra.mxu0 0.0
    %239 = vmatprep.subr.mxu0 0.0
    %240 = vmatpush1.xpose.msra.mxu0 0.0
    %241 = vmatprep.subr.mxu0 0.0
    %242 = vmatpush1.xpose.msra.mxu0 0.0
    %243 = vmatprep.subr.mxu0 0.0
    %244 = vmatpush1.xpose.msra.mxu0 0.0
    %245 = vmatprep.subr.mxu0 0.0
    %246 = vmatpush1.xpose.msra.mxu0 0.0
    %247 = vmatprep.subr.mxu0 0.0
    %248 = vmatpush1.xpose.msra.mxu0 0.0
    %249 = vmatprep.subr.mxu0 0.0
    %250 = vmatpush1.xpose.msra.mxu0 0.0
    %251 = vmatprep.subr.mxu0 0.0
    %252 = vmatpush1.xpose.msra.mxu0 0.0
    %253 = vmatprep.subr.mxu0 0.0
    %254 = vmatpush1.xpose.msra.mxu0 0.0
    %255 = vmatprep.subr.mxu0 0.0
    %256 = vmatpush1.xpose.msra.mxu0 0.0
    %257 = vmatprep.subr.mxu0 0.0
    %258 = vmatpush1.xpose.msra.mxu0 0.0
    %259 = vmatprep.subr.mxu0 0.0
    %260 = vmatpush1.xpose.msra.mxu0 0.0
    %261 = vmatprep.subr.mxu0 0.0
    %262 = vmatpush1.xpose.msra.mxu0 0.0
    %263 = vmatprep.subr.mxu0 0.0
    %264 = vmatpush1.xpose.msra.mxu0 0.0
    %265 = vmatprep.subr.mxu0 0.0
    %266 = vmatpush1.xpose.msra.mxu0 0.0
    %267 = vmatprep.subr.mxu0 0.0
    %268 = vmatpush1.xpose.msra.mxu0 0.0
    %269 = vmatprep.subr.mxu0 0.0
    %270 = vmatpush1.xpose.msra.mxu0 0.0
    %271 = vmatprep.subr.mxu0 0.0
    %272 = vmatpush1.xpose.msra.mxu0 0.0
    %273 = vmatprep.subr.mxu0 0.0
    %274 = vmatpush1.xpose.msra.mxu0 0.0
    %275 = vmatprep.subr.mxu0 0.0
    %276 = vmatpush1.xpose.msra.mxu0 0.0
    %277 = vmatprep.subr.mxu0 0.0
    %278 = vmatpush1.xpose.msra.mxu0 0.0
    %279 = vmatprep.subr.mxu0 0.0
    %280 = vmatpush1.xpose.msra.mxu0 0.0
    %281 = vmatprep.subr.mxu0 0.0
    %282 = vmatpush1.xpose.msra.mxu0 0.0
    %283 = vmatprep.mubr.f32.mxu0 %v46
    %284 = vmatmul.mubr.f32.gmra.mrb[0].mxu0 %v45
    %v285 = vpop.f32.mrb[0].mxu0
    %v286 = vadd.f32 %v216, %v285
    %v287 = vpop.f32.mrb[0].mxu0
    %288 = vdwg.mxu0
    %289 = vmatprep.subr.mxu0 0.0
    %290 = vmatpush1.xpose.msra.mxu0 %v74
    %291 = vmatprep.subr.mxu0 0.0
    %292 = vmatpush1.xpose.msra.mxu0 %v77
    %293 = vmatprep.subr.mxu0 0.0
    %294 = vmatpush1.xpose.msra.mxu0 0.0
    %295 = vmatprep.subr.mxu0 0.0
    %296 = vmatpush1.xpose.msra.mxu0 0.0
    %297 = vmatprep.subr.mxu0 0.0
    %298 = vmatpush1.xpose.msra.mxu0 0.0
    %299 = vmatprep.subr.mxu0 0.0
    %300 = vmatpush1.xpose.msra.mxu0 0.0
    %301 = vmatprep.subr.mxu0 0.0
    %302 = vmatpush1.xpose.msra.mxu0 0.0
    %303 = vmatprep.subr.mxu0 0.0
    %304 = vmatpush1.xpose.msra.mxu0 0.0
    %305 = vmatprep.subr.mxu0 0.0
    %306 = vmatpush1.xpose.msra.mxu0 0.0
    %307 = vmatprep.subr.mxu0 0.0
    %308 = vmatpush1.xpose.msra.mxu0 0.0
    %309 = vmatprep.subr.mxu0 0.0
    %310 = vmatpush1.xpose.msra.mxu0 0.0
    %311 = vmatprep.subr.mxu0 0.0
    %312 = vmatpush1.xpose.msra.mxu0 0.0
    %313 = vmatprep.subr.mxu0 0.0
    %314 = vmatpush1.xpose.msra.mxu0 0.0
    %315 = vmatprep.subr.mxu0 0.0
    %316 = vmatpush1.xpose.msra.mxu0 0.0
    %317 = vmatprep.subr.mxu0 0.0
    %318 = vmatpush1.xpose.msra.mxu0 0.0
    %319 = vmatprep.subr.mxu0 0.0
    %320 = vmatpush1.xpose.msra.mxu0 0.0
    %321 = vmatprep.subr.mxu0 0.0
    %322 = vmatpush1.xpose.msra.mxu0 0.0
    %323 = vmatprep.subr.mxu0 0.0
    %324 = vmatpush1.xpose.msra.mxu0 0.0
    %325 = vmatprep.subr.mxu0 0.0
    %326 = vmatpush1.xpose.msra.mxu0 0.0
    %327 = vmatprep.subr.mxu0 0.0
    %328 = vmatpush1.xpose.msra.mxu0 0.0
    %329 = vmatprep.subr.mxu0 0.0
    %330 = vmatpush1.xpose.msra.mxu0 0.0
    %331 = vmatprep.subr.mxu0 0.0
    %332 = vmatpush1.xpose.msra.mxu0 0.0
    %333 = vmatprep.subr.mxu0 0.0
    %334 = vmatpush1.xpose.msra.mxu0 0.0
    %335 = vmatprep.subr.mxu0 0.0
    %336 = vmatpush1.xpose.msra.mxu0 0.0
    %337 = vmatprep.subr.mxu0 0.0
    %338 = vmatpush1.xpose.msra.mxu0 0.0
    %339 = vmatprep.subr.mxu0 0.0
    %340 = vmatpush1.xpose.msra.mxu0 0.0
    %341 = vmatprep.subr.mxu0 0.0
    %342 = vmatpush1.xpose.msra.mxu0 0.0
    %343 = vmatprep.subr.mxu0 0.0
    %344 = vmatpush1.xpose.msra.mxu0 0.0
    %345 = vmatprep.subr.mxu0 0.0
    %346 = vmatpush1.xpose.msra.mxu0 0.0
    %347 = vmatprep.subr.mxu0 0.0
    %348 = vmatpush1.xpose.msra.mxu0 0.0
    %349 = vmatprep.subr.mxu0 0.0
    %350 = vmatpush1.xpose.msra.mxu0 0.0
    %351 = vmatprep.subr.mxu0 0.0
    %352 = vmatpush1.xpose.msra.mxu0 0.0
    %353 = vmatprep.mubr.f32.mxu0 0.0
    %354 = vmatmul.mubr.f32.gmra.mrb[0].mxu0 %v71
    %v355 = vpop.f32.mrb[0].mxu0
    %v356 = vadd.f32 %v286, %v355
    %v357 = vpop.f32.mrb[0].mxu0
    %358 = vdwg.mxu0
    %vm359 = vcmask 80896
    %360 = vst.msk [vmem:[#allocation7] sm:$0xff] %vm359, %v356
    // Predicated region
    $region22: #{tpu_custom_call.1} parent=1 // pred_check
      _
    $region23: #{tpu_custom_call.1} parent=1 // pred_check_branch
      %362 = sbr.rel (0) target = $region25
    $region24: #{tpu_custom_call.1} parent=1 // pred_region
      %s364 = ssub.s32 128, 128
      %365 = vsyncadd [#allocation4], %s364
      %s367 = sshll.u32 [#allocation7], 4
      %s368 = int_to_ptr.vmem [resolvable:$true] %s367
      %370 = dma.vmem_to_hbm [thread:$0]  %s368, 128, %s3, [#allocation4]
    $region25: #{tpu_custom_call.1} parent=1 // pred_fallthru
      _
    // Predicated region
    $region26: #{tpu_custom_call.1} parent=1 // pred_check
      _
    $region27: #{tpu_custom_call.1} parent=1 // pred_check_branch
      %372 = sbr.rel (0) target = $region29
    $region28: #{tpu_custom_call.1} parent=1 // pred_region
      %373 = dma.done [#allocation4], 128
    $region29: #{tpu_custom_call.1} parent=1 // pred_fallthru
      _
    %374 = vsyncpa [#allocation3], 1
    %375 = vsyncpa [#allocation6], 1
    %376 = vsyncpa [#allocation4], 1

</llo_original>
